<compile_context>
chip_gen: v7x
topology: tpu7x:2x2x1
jax: 0.10.0
libtpu: 0.0.40
codegen_flags: <defaults>
</compile_context>

<pallas_src>
import functools

import jax
import jax.numpy as jnp
from jax.experimental import pallas as pl
from jax.experimental.pallas import tpu as pltpu

LANE = 128
SUBLANE = 8


def _round_up(a, b):
    return (a + b - 1) // b * b


def mlp_kernel(x_ref, w1_ref, b1_ref, w2_ref, b2_ref, w3_ref, b3_ref, o_ref):
    # x / weights are bf16 (MXU native); accumulate in f32; bias + ReLU in f32
    # on the VPU (v5e has no bf16 VPU path).
    x = x_ref[...]

    # Layer 1: Linear + ReLU
    h1 = jnp.dot(x, w1_ref[...], preferred_element_type=jnp.float32) + b1_ref[...]
    h1 = jnp.maximum(h1, 0.0)

    # Layer 2: Linear + ReLU
    h2 = (
        jnp.dot(h1.astype(jnp.bfloat16), w2_ref[...],
                preferred_element_type=jnp.float32)
        + b2_ref[...]
    )
    h2 = jnp.maximum(h2, 0.0)

    # Layer 3: Linear (lane-dense, 128-wide padded output, stored as bf16)
    o = (
        jnp.dot(h2.astype(jnp.bfloat16), w3_ref[...],
                preferred_element_type=jnp.float32)
        + b3_ref[...]
    )
    o_ref[...] = o.astype(o_ref.dtype)


def network_forward(x, params, out_dims=5):
    """x: (B, input_dims), any float dtype (cast to bf16 for the kernel).
    params: w1,b1,w2,b2,w3,b3 with weights bf16 shaped (in, out), biases f32
    shaped (1, out); w3/b3 are ALREADY lane-padded to a multiple of 128
    columns (done once in init_params). Returns (B, out_dims) bfloat16."""
    w1, b1 = params["w1"], params["b1"]
    w2, b2 = params["w2"], params["b2"]
    w3, b3 = params["w3"], params["b3"]

    B, in_dims = x.shape
    hidden = w1.shape[1]
    out_pad = w3.shape[1]          # already padded to a multiple of LANE

    if x.dtype != jnp.bfloat16:
        x = x.astype(jnp.bfloat16)

    # Batch tiling: pick the largest sublane-aligned tile up to 1024 rows, but
    # whenever the batch supports >= 2 tiles, split so the "parallel" grid axis
    # can feed both v7x TensorCores (neutral on v5e/v6e).
    B_al = _round_up(B, SUBLANE)
    if B_al >= 2 * SUBLANE:
        TB = min(1024, _round_up(B_al // 2, SUBLANE))
    else:
        TB = B_al
    B_pad = _round_up(B_al, TB)
    if B_pad != B:
        x = jnp.zeros((B_pad, in_dims), x.dtype).at[:B].set(x)
    n_tiles = B_pad // TB

    flops = 2 * B_pad * (in_dims * hidden + hidden * hidden + hidden * out_pad)
    bytes_accessed = (
        x.size * x.dtype.itemsize
        + sum(p.size * p.dtype.itemsize for p in (w1, b1, w2, b2, w3, b3))
        + B_pad * out_pad * 2          # bf16 output writeback
    )

    out = pl.pallas_call(
        mlp_kernel,
        out_shape=jax.ShapeDtypeStruct((B_pad, out_pad), jnp.bfloat16),
        grid=(n_tiles,),
        in_specs=[
            pl.BlockSpec((TB, in_dims), lambda i: (i, 0)),      # x: tiled over batch
            pl.BlockSpec((in_dims, hidden), lambda i: (0, 0)),  # w1: VMEM-resident
            pl.BlockSpec((1, hidden), lambda i: (0, 0)),        # b1
            pl.BlockSpec((hidden, hidden), lambda i: (0, 0)),   # w2
            pl.BlockSpec((1, hidden), lambda i: (0, 0)),        # b2
            pl.BlockSpec((hidden, out_pad), lambda i: (0, 0)),  # w3 (pre-padded)
            pl.BlockSpec((1, out_pad), lambda i: (0, 0)),       # b3 (pre-padded)
        ],
        out_specs=pl.BlockSpec((TB, out_pad), lambda i: (i, 0)),
        compiler_params=pltpu.CompilerParams(
            dimension_semantics=("parallel",),
        ),
        cost_estimate=pl.CostEstimate(
            flops=flops, transcendentals=0, bytes_accessed=bytes_accessed),
    )(x, w1, b1, w2, b2, w3, b3)

    # Strip batch padding and the lane padding of the final layer.
    return out[:B, :out_dims]


def init_params(key, input_dims=12, hidden_size=128, output_dims=5):
    """Init matching the PyTorch module (xavier_normal_ weights, U[0,1) biases).
    Weights stored transposed (in, out) in bf16; the final layer is zero-padded
    to a multiple of 128 output columns ONCE here (not per forward call)."""
    def xavier_normal(k, fan_in, fan_out):
        std = (2.0 / (fan_in + fan_out)) ** 0.5
        w = std * jax.random.normal(k, (fan_in, fan_out), dtype=jnp.float32)
        return w.astype(jnp.bfloat16)

    k = jax.random.split(key, 6)
    out_pad = _round_up(output_dims, LANE)

    w3 = xavier_normal(k[4], hidden_size, output_dims)
    b3 = jax.random.uniform(k[5], (1, output_dims), dtype=jnp.float32)
    w3p = jnp.zeros((hidden_size, out_pad), jnp.bfloat16).at[:, :output_dims].set(w3)
    b3p = jnp.zeros((1, out_pad), jnp.float32).at[:, :output_dims].set(b3)

    return {
        "w1": xavier_normal(k[0], input_dims, hidden_size),
        "b1": jax.random.uniform(k[1], (1, hidden_size), dtype=jnp.float32),
        "w2": xavier_normal(k[2], hidden_size, hidden_size),
        "b2": jax.random.uniform(k[3], (1, hidden_size), dtype=jnp.float32),
        "w3": w3p,
        "b3": b3p,
    }


def reference_forward(x, params, out_dims=5):
    """Plain-JAX reference doing the same math (bf16 operands, f32 accumulate)."""
    h1 = jnp.dot(x.astype(jnp.bfloat16), params["w1"],
                 preferred_element_type=jnp.float32) + params["b1"]
    h1 = jnp.maximum(h1, 0.0)
    h2 = jnp.dot(h1.astype(jnp.bfloat16), params["w2"],
                 preferred_element_type=jnp.float32) + params["b2"]
    h2 = jnp.maximum(h2, 0.0)
    o = jnp.dot(h2.astype(jnp.bfloat16), params["w3"],
                preferred_element_type=jnp.float32) + params["b3"]
    return o[:, :out_dims]


if __name__ == "__main__":
    key = jax.random.PRNGKey(0)
    pkey, xkey = jax.random.split(key)

    input_dims, hidden_size, output_dims = 12, 128, 5
    batch = 8

    params = init_params(pkey, input_dims, hidden_size, output_dims)
    x = jax.random.normal(xkey, (batch, input_dims), dtype=jnp.float32)

    fwd = jax.jit(functools.partial(network_forward, out_dims=output_dims))
    out = fwd(x, params)
    out = jax.block_until_ready(out)

    ref = reference_forward(x, params, out_dims=output_dims)
    assert out.shape == (batch, output_dims), out.shape
    err = jnp.max(jnp.abs(out.astype(jnp.float32) - ref))
    assert jnp.allclose(out.astype(jnp.float32), ref, atol=5e-2, rtol=5e-2), (
        f"max abs err {err}")

    print("KERNEL_OK")
</pallas_src>

<mosaic_0001>
module attributes {stable_mosaic.version = 11 : i64} {
  func.func @mlp_kernel(%arg0: i32, %arg1: memref<8x12xbf16, #tpu.memory_space<vmem>>, %arg2: memref<12x128xbf16, #tpu.memory_space<vmem>>, %arg3: memref<1x128xf32, #tpu.memory_space<vmem>>, %arg4: memref<128x128xbf16, #tpu.memory_space<vmem>>, %arg5: memref<1x128xf32, #tpu.memory_space<vmem>>, %arg6: memref<128x128xbf16, #tpu.memory_space<vmem>>, %arg7: memref<1x128xf32, #tpu.memory_space<vmem>>, %arg8: memref<8x128xbf16, #tpu.memory_space<vmem>>) attributes {dimension_semantics = [#tpu.dimension_semantics<parallel>], iteration_bounds = array<i64: 1>, scalar_prefetch = 0 : i64, scratch_operands = 0 : i64, tpu.core_type = #tpu.core_type<tc>, window_params = [{transform_indices = @transform_0, window_bounds = array<i64: 8, 12>}, {pipeline_mode = #tpu.pipeline_mode<synchronous>, transform_indices = @transform_1, window_bounds = array<i64: 12, 128>}, {pipeline_mode = #tpu.pipeline_mode<synchronous>, transform_indices = @transform_2, window_bounds = array<i64: 1, 128>}, {pipeline_mode = #tpu.pipeline_mode<synchronous>, transform_indices = @transform_3, window_bounds = array<i64: 128, 128>}, {pipeline_mode = #tpu.pipeline_mode<synchronous>, transform_indices = @transform_4, window_bounds = array<i64: 1, 128>}, {pipeline_mode = #tpu.pipeline_mode<synchronous>, transform_indices = @transform_5, window_bounds = array<i64: 128, 128>}, {pipeline_mode = #tpu.pipeline_mode<synchronous>, transform_indices = @transform_6, window_bounds = array<i64: 1, 128>}, {transform_indices = @transform_7, window_bounds = array<i64: 8, 128>}]} {
    %c0 = arith.constant 0 : index
    %c0_0 = arith.constant 0 : index
    %0 = vector.load %arg1[%c0, %c0_0] : memref<8x12xbf16, #tpu.memory_space<vmem>>, vector<8x12xbf16>
    %c0_1 = arith.constant 0 : index
    %c0_2 = arith.constant 0 : index
    %1 = vector.load %arg2[%c0_1, %c0_2] : memref<12x128xbf16, #tpu.memory_space<vmem>>, vector<12x128xbf16>
    %cst = arith.constant dense<0.000000e+00> : vector<8x128xf32>
    %2 = tpu.matmul %0, %1, %cst {dimension_numbers = #tpu.dot_dimension_numbers<[1], [0], [0], [1], [0, 0, 1, 1], [], []>} : vector<8x12xbf16>, vector<12x128xbf16>, vector<8x128xf32> -> vector<8x128xf32>
    %c0_3 = arith.constant 0 : index
    %c0_4 = arith.constant 0 : index
    %3 = vector.load %arg3[%c0_3, %c0_4] : memref<1x128xf32, #tpu.memory_space<vmem>>, vector<1x128xf32>
    %4 = vector.broadcast %3 : vector<1x128xf32> to vector<8x128xf32>
    %5 = arith.addf %2, %4 : vector<8x128xf32>
    %cst_5 = arith.constant 0.000000e+00 : f32
    %6 = vector.broadcast %cst_5 : f32 to vector<8x128xf32>
    %7 = arith.maximumf %5, %6 : vector<8x128xf32>
    %8 = arith.truncf %7 : vector<8x128xf32> to vector<8x128xbf16>
    %c0_6 = arith.constant 0 : index
    %c0_7 = arith.constant 0 : index
    %9 = vector.load %arg4[%c0_6, %c0_7] : memref<128x128xbf16, #tpu.memory_space<vmem>>, vector<128x128xbf16>
    %cst_8 = arith.constant dense<0.000000e+00> : vector<8x128xf32>
    %10 = tpu.matmul %8, %9, %cst_8 {dimension_numbers = #tpu.dot_dimension_numbers<[1], [0], [0], [1], [0, 0, 1, 1], [], []>} : vector<8x128xbf16>, vector<128x128xbf16>, vector<8x128xf32> -> vector<8x128xf32>
    %c0_9 = arith.constant 0 : index
    %c0_10 = arith.constant 0 : index
    %11 = vector.load %arg5[%c0_9, %c0_10] : memref<1x128xf32, #tpu.memory_space<vmem>>, vector<1x128xf32>
    %12 = vector.broadcast %11 : vector<1x128xf32> to vector<8x128xf32>
    %13 = arith.addf %10, %12 : vector<8x128xf32>
    %cst_11 = arith.constant 0.000000e+00 : f32
    %14 = vector.broadcast %cst_11 : f32 to vector<8x128xf32>
    %15 = arith.maximumf %13, %14 : vector<8x128xf32>
    %16 = arith.truncf %15 : vector<8x128xf32> to vector<8x128xbf16>
    %c0_12 = arith.constant 0 : index
    %c0_13 = arith.constant 0 : index
    %17 = vector.load %arg6[%c0_12, %c0_13] : memref<128x128xbf16, #tpu.memory_space<vmem>>, vector<128x128xbf16>
    %cst_14 = arith.constant dense<0.000000e+00> : vector<8x128xf32>
    %18 = tpu.matmul %16, %17, %cst_14 {dimension_numbers = #tpu.dot_dimension_numbers<[1], [0], [0], [1], [0, 0, 1, 1], [], []>} : vector<8x128xbf16>, vector<128x128xbf16>, vector<8x128xf32> -> vector<8x128xf32>
    %c0_15 = arith.constant 0 : index
    %c0_16 = arith.constant 0 : index
    %19 = vector.load %arg7[%c0_15, %c0_16] : memref<1x128xf32, #tpu.memory_space<vmem>>, vector<1x128xf32>
    %20 = vector.broadcast %19 : vector<1x128xf32> to vector<8x128xf32>
    %21 = arith.addf %18, %20 : vector<8x128xf32>
    %22 = arith.truncf %21 : vector<8x128xf32> to vector<8x128xbf16>
    %c0_17 = arith.constant 0 : index
    %c0_18 = arith.constant 0 : index
    %23 = vector.load %arg8[%c0_17, %c0_18] : memref<8x128xbf16, #tpu.memory_space<vmem>>, vector<8x128xbf16>
    tpu.vector_store %arg8[%c0_17, %c0_18], %22 {strides = array<i32>} : memref<8x128xbf16, #tpu.memory_space<vmem>>, vector<8x128xbf16>,
    return
  }
  func.func @transform_0(%arg0: i32) -> (i32, i32) {
    %c0_i32 = arith.constant 0 : i32
    %c0_i32_0 = arith.constant 0 : i32
    return %arg0, %c0_i32 : i32, i32
  }
  func.func @transform_1(%arg0: i32) -> (i32, i32) {
    %c0_i32 = arith.constant 0 : i32
    %c0_i32_0 = arith.constant 0 : i32
    %c0_i32_1 = arith.constant 0 : i32
    return %c0_i32, %c0_i32_0 : i32, i32
  }
  func.func @transform_2(%arg0: i32) -> (i32, i32) {
    %c0_i32 = arith.constant 0 : i32
    %c0_i32_0 = arith.constant 0 : i32
    %c0_i32_1 = arith.constant 0 : i32
    return %c0_i32, %c0_i32_0 : i32, i32
  }
  func.func @transform_3(%arg0: i32) -> (i32, i32) {
    %c0_i32 = arith.constant 0 : i32
    %c0_i32_0 = arith.constant 0 : i32
    %c0_i32_1 = arith.constant 0 : i32
    return %c0_i32, %c0_i32_0 : i32, i32
  }
  func.func @transform_4(%arg0: i32) -> (i32, i32) {
    %c0_i32 = arith.constant 0 : i32
    %c0_i32_0 = arith.constant 0 : i32
    %c0_i32_1 = arith.constant 0 : i32
    return %c0_i32, %c0_i32_0 : i32, i32
  }
  func.func @transform_5(%arg0: i32) -> (i32, i32) {
    %c0_i32 = arith.constant 0 : i32
    %c0_i32_0 = arith.constant 0 : i32
    %c0_i32_1 = arith.constant 0 : i32
    return %c0_i32, %c0_i32_0 : i32, i32
  }
  func.func @transform_6(%arg0: i32) -> (i32, i32) {
    %c0_i32 = arith.constant 0 : i32
    %c0_i32_0 = arith.constant 0 : i32
    %c0_i32_1 = arith.constant 0 : i32
    return %c0_i32, %c0_i32_0 : i32, i32
  }
  func.func @transform_7(%arg0: i32) -> (i32, i32) {
    %c0_i32 = arith.constant 0 : i32
    %c0_i32_0 = arith.constant 0 : i32
    return %arg0, %c0_i32 : i32, i32
  }
}

</mosaic_0001>

<llo_original>
// kernel: network_forward.1
$region0: #{network_forward.1}
  #allocation0 [shape = 'u32[]', space=smem, size = 0x4, offset = 0x4, fixed_abs, tag = 'smem constant byte address 0x4 - core index']
  #allocation1 [shape = 'u32[144,128]{1,0:T(1,128)}', space=vmem, size = 0x12000, scoped, tag = 'internal scratch']
  %s0 = inlined_call_operand.vmem [shape: bf16[8,12], index: 0, kind: input, shape index: {}]
  %s1 = inlined_call_operand.vmem [shape: bf16[12,128], index: 1, kind: input, shape index: {}]
  %s2 = inlined_call_operand.vmem [shape: f32[1,128], index: 2, kind: input, shape index: {}]
  %s3 = inlined_call_operand.hbm [shape: bf16[128,128], index: 3, kind: input, shape index: {}]
  %s4 = inlined_call_operand.vmem [shape: f32[1,128], index: 4, kind: input, shape index: {}]
  %s5 = inlined_call_operand.hbm [shape: bf16[128,128], index: 5, kind: input, shape index: {}]
  %s6 = inlined_call_operand.vmem [shape: f32[1,128], index: 6, kind: input, shape index: {}]
  %s7 = inlined_call_operand.hbm [shape: bf16[8,128], index: 7, kind: output, shape index: {}]
  %s8 = sld [smem:[#allocation0]]
  $region46: #{network_forward.1} parent=0
    _
  %s10 = ssub.s32 1, %s8
  %s11 = scalar_select 0, %s10, %s8
  $region1: #{network_forward.1} parent=0
    #allocation2 [shape = 'u8[32768]{0}', space=vmem, size = 0x8000, scoped, tag = 'input window, operand 3, single buffered']
    #allocation3 [shape = 's32[1]{0}', space=sflag, size = 0x4, scoped, tag = 'scoped memory for network_forward.1']
    #allocation4 [shape = 's32[1]{0}', space=sflag, size = 0x4, scoped, tag = 'scoped memory for network_forward.1']
    #allocation5 [shape = 'u8[32768]{0}', space=vmem, size = 0x8000, scoped, tag = 'input window, operand 5, single buffered']
    #allocation6 [shape = 's32[1]{0}', space=sflag, size = 0x4, scoped, tag = 'scoped memory for network_forward.1']
    #allocation7 [shape = 'u8[2048]{0}', space=vmem, size = 0x800, scoped, tag = 'output window, operand 0, single buffered']
    %12 = vsyncpa [#allocation3], 0
    %13 = vsyncpa [#allocation6], 0
    %14 = vsyncpa [#allocation4], 0
    // Predicated region
    $region2: #{network_forward.1} parent=1 // pred_check
      _
    $region3: #{network_forward.1} parent=1 // pred_check_branch
      %16 = sbr.rel (0) target = $region5
    $region4: #{network_forward.1} parent=1 // pred_region
      _
    $region5: #{network_forward.1} parent=1 // pred_fallthru
      _
    // Predicated region
    $region6: #{network_forward.1} parent=1 // pred_check
      _
    $region7: #{network_forward.1} parent=1 // pred_check_branch
      %18 = sbr.rel (0) target = $region9
    $region8: #{network_forward.1} parent=1 // pred_region
      _
    $region9: #{network_forward.1} parent=1 // pred_fallthru
      _
    // Predicated region
    $region10: #{network_forward.1} parent=1 // pred_check
      _
    $region11: #{network_forward.1} parent=1 // pred_check_branch
      %20 = sbr.rel (0) target = $region13
    $region12: #{network_forward.1} parent=1 // pred_region
      _
    $region13: #{network_forward.1} parent=1 // pred_fallthru
      _
    // Predicated region
    $region14: #{network_forward.1} parent=1 // pred_check
      _
    $region15: #{network_forward.1} parent=1 // pred_check_branch
      %22 = sbr.rel (0) target = $region17
    $region16: #{network_forward.1} parent=1 // pred_region
      %s24 = ssub.s32 1024, 1024
      %25 = vsyncadd [#allocation3], %s24
      %s26 = sshll.u32 [#allocation2], 4
      %s27 = int_to_ptr.vmem [resolvable:$true] %s26
      %32 = dma.hbm_to_vmem [thread:$0]  %s3, 1024, %s27, [#allocation3], 64, 64, 4
    $region17: #{network_forward.1} parent=1 // pred_fallthru
      _
    // Predicated region
    $region18: #{network_forward.1} parent=1 // pred_check
      _
    $region19: #{network_forward.1} parent=1 // pred_check_branch
      %34 = sbr.rel (0) target = $region21
    $region20: #{network_forward.1} parent=1 // pred_region
      _
    $region21: #{network_forward.1} parent=1 // pred_fallthru
      _
    // Predicated region
    $region22: #{network_forward.1} parent=1 // pred_check
      _
    $region23: #{network_forward.1} parent=1 // pred_check_branch
      %36 = sbr.rel (0) target = $region25
    $region24: #{network_forward.1} parent=1 // pred_region
      %s38 = ssub.s32 1024, 1024
      %39 = vsyncadd [#allocation6], %s38
      %s40 = sshll.u32 [#allocation5], 4
      %s41 = int_to_ptr.vmem [resolvable:$true] %s40
      %46 = dma.hbm_to_vmem [thread:$0]  %s5, 1024, %s41, [#allocation6], 64, 64, 4
    $region25: #{network_forward.1} parent=1 // pred_fallthru
      _
    // Predicated region
    $region26: #{network_forward.1} parent=1 // pred_check
      _
    $region27: #{network_forward.1} parent=1 // pred_check_branch
      %48 = sbr.rel (0) target = $region29
    $region28: #{network_forward.1} parent=1 // pred_region
      _
    $region29: #{network_forward.1} parent=1 // pred_fallthru
      _
    // Predicated region
    $region30: #{network_forward.1} parent=1 // pred_check
      _
    $region31: #{network_forward.1} parent=1 // pred_check_branch
      %50 = sbr.rel (0) target = $region33
    $region32: #{network_forward.1} parent=1 // pred_region
      %51 = dma.done [#allocation3], 1024
    $region33: #{network_forward.1} parent=1 // pred_fallthru
      _
    // Predicated region
    $region34: #{network_forward.1} parent=1 // pred_check
      _
    $region35: #{network_forward.1} parent=1 // pred_check_branch
      %53 = sbr.rel (0) target = $region37
    $region36: #{network_forward.1} parent=1 // pred_region
      %54 = dma.done [#allocation6], 1024
    $region37: #{network_forward.1} parent=1 // pred_fallthru
      _
    %v56 = vld [vmem:[%s0] sm:$0xf]
    %v57 = vld [vmem:[%s1] sm:$0xf]
    %v58 = vld [vmem:[%s1 + $0x4] sm:$0x3]
    %v59 = vld [vmem:[%s2] sm:$0x1]
    %v61 = vlaneseq
    %v62 = vshrl.u32 %v61, 7
    %v63 = vsub.s32 0, %v62
    %v64 = vrot.slane %v59, %v63
    %v68 = vunpack.c.l.b16 %v57
    %v69 = vunpack.c.l.b16 %v58
    %v70 = vpack.c.b16 %v69, %v68
    %vm71 = vcmask 97280
    %v73 = vsel %vm71, %v56, 0
    %vm75 = vcmask 1045504
    %v77 = vsel %vm75, %v70, 0
    %79 = vmatprep.subr.bf16.mxu0 0
    %80 = vmatpush1.bf16.msra.mxu0 %v77
    %81 = vmatprep.subr.bf16.mxu0 0
    %82 = vmatpush1.bf16.msra.mxu0 0
    %83 = vmatprep.subr.bf16.mxu0 0
    %84 = vmatpush1.bf16.msra.mxu0 0
    %85 = vmatprep.subr.bf16.mxu0 0
    %86 = vmatpush1.bf16.msra.mxu0 0
    %87 = vmatprep.subr.bf16.mxu0 0
    %88 = vmatpush1.bf16.msra.mxu0 0
    %89 = vmatprep.subr.bf16.mxu0 0
    %90 = vmatpush1.bf16.msra.mxu0 0
    %91 = vmatprep.subr.bf16.mxu0 0
    %92 = vmatpush1.bf16.msra.mxu0 0
    %93 = vmatprep.subr.bf16.mxu0 0
    %94 = vmatpush1.bf16.msra.mxu0 0
    %95 = vmatprep.subr.bf16.mxu0 0
    %96 = vmatpush1.bf16.msra.mxu0 0
    %97 = vmatprep.subr.bf16.mxu0 0
    %98 = vmatpush1.bf16.msra.mxu0 0
    %99 = vmatprep.subr.bf16.mxu0 0
    %100 = vmatpush1.bf16.msra.mxu0 0
    %101 = vmatprep.subr.bf16.mxu0 0
    %102 = vmatpush1.bf16.msra.mxu0 0
    %103 = vmatprep.subr.bf16.mxu0 0
    %104 = vmatpush1.bf16.msra.mxu0 0
    %105 = vmatprep.subr.bf16.mxu0 0
    %106 = vmatpush1.bf16.msra.mxu0 0
    %107 = vmatprep.subr.bf16.mxu0 0
    %108 = vmatpush1.bf16.msra.mxu0 0
    %109 = vmatprep.subr.bf16.mxu0 0
    %110 = vmatpush1.bf16.msra.mxu0 0
    %111 = vmatprep.mubr.bf16.mxu0 0
    %112 = vmatmul.mubr.bf16.gmra.mrb[0].mxu0 %v73
    %v113 = vpop.f32.mrb[0].mxu0
    %v114 = vadd.f32 %v64, %v113
    %v115 = vpop.f32.mrb[0].mxu0
    %v116 = vpop.f32.mrb[0].mxu0
    %v117 = vpop.f32.mrb[0].mxu0
    %118 = vdwg.mxu0
    %v119 = vmax.f32 %v114, 0.0
    %v120 = vpack.c.bf16 %v119, %v119
    %v121 = vld [vmem:[#allocation2] sm:$0xf]
    %v122 = vld [vmem:[#allocation2 + $0x4] sm:$0xf]
    %v123 = vld [vmem:[#allocation2 + $0x8] sm:$0xf]
    %v124 = vld [vmem:[#allocation2 + $0xc] sm:$0xf]
    %v125 = vld [vmem:[#allocation2 + $0x10] sm:$0xf]
    %v126 = vld [vmem:[#allocation2 + $0x14] sm:$0xf]
    %v127 = vld [vmem:[#allocation2 + $0x18] sm:$0xf]
    %v128 = vld [vmem:[#allocation2 + $0x1c] sm:$0xf]
    %v129 = vld [vmem:[#allocation2 + $0x20] sm:$0xf]
    %v130 = vld [vmem:[#allocation2 + $0x24] sm:$0xf]
    %v131 = vld [vmem:[#allocation2 + $0x28] sm:$0xf]
    %v132 = vld [vmem:[#allocation2 + $0x2c] sm:$0xf]
    %v133 = vld [vmem:[#allocation2 + $0x30] sm:$0xf]
    %v134 = vld [vmem:[#allocation2 + $0x34] sm:$0xf]
    %v135 = vld [vmem:[#allocation2 + $0x38] sm:$0xf]
    %v136 = vld [vmem:[#allocation2 + $0x3c] sm:$0xf]
    %v137 = vld [vmem:[%s4] sm:$0x1]
    %v139 = vlaneseq
    %v140 = vshrl.u32 %v139, 7
    %v141 = vsub.s32 0, %v140
    %v142 = vrot.slane %v137, %v141
    %v160 = vunpack.c.l.b16 %v121
    %v161 = vunpack.c.l.b16 %v122
    %v162 = vunpack.c.l.b16 %v123
    %v163 = vunpack.c.l.b16 %v124
    %v164 = vunpack.c.l.b16 %v125
    %v165 = vunpack.c.l.b16 %v126
    %v166 = vunpack.c.l.b16 %v127
    %v167 = vunpack.c.l.b16 %v128
    %v168 = vunpack.c.l.b16 %v129
    %v169 = vunpack.c.l.b16 %v130
    %v170 = vunpack.c.l.b16 %v131
    %v171 = vunpack.c.l.b16 %v132
    %v172 = vunpack.c.l.b16 %v133
    %v173 = vunpack.c.l.b16 %v134
    %v174 = vunpack.c.l.b16 %v135
    %v175 = vunpack.c.l.b16 %v136
    %v176 = vpack.c.b16 %v161, %v160
    %v177 = vpack.c.b16 %v163, %v162
    %v178 = vpack.c.b16 %v165, %v164
    %v179 = vpack.c.b16 %v167, %v166
    %v180 = vpack.c.b16 %v169, %v168
    %v181 = vpack.c.b16 %v171, %v170
    %v182 = vpack.c.b16 %v173, %v172
    %v183 = vpack.c.b16 %v175, %v174
    %192 = vmatprep.subr.bf16.mxu0 0
    %193 = vmatpush1.bf16.msra.mxu0 %v176
    %194 = vmatprep.subr.bf16.mxu0 0
    %195 = vmatpush1.bf16.msra.mxu0 %v177
    %196 = vmatprep.subr.bf16.mxu0 0
    %197 = vmatpush1.bf16.msra.mxu0 %v178
    %198 = vmatprep.subr.bf16.mxu0 0
    %199 = vmatpush1.bf16.msra.mxu0 %v179
    %200 = vmatprep.subr.bf16.mxu0 0
    %201 = vmatpush1.bf16.msra.mxu0 %v180
    %202 = vmatprep.subr.bf16.mxu0 0
    %203 = vmatpush1.bf16.msra.mxu0 %v181
    %204 = vmatprep.subr.bf16.mxu0 0
    %205 = vmatpush1.bf16.msra.mxu0 %v182
    %206 = vmatprep.subr.bf16.mxu0 0
    %207 = vmatpush1.bf16.msra.mxu0 %v183
    %208 = vmatprep.subr.bf16.mxu0 0
    %209 = vmatpush1.bf16.msra.mxu0 0
    %210 = vmatprep.subr.bf16.mxu0 0
    %211 = vmatpush1.bf16.msra.mxu0 0
    %212 = vmatprep.subr.bf16.mxu0 0
    %213 = vmatpush1.bf16.msra.mxu0 0
    %214 = vmatprep.subr.bf16.mxu0 0
    %215 = vmatpush1.bf16.msra.mxu0 0
    %216 = vmatprep.subr.bf16.mxu0 0
    %217 = vmatpush1.bf16.msra.mxu0 0
    %218 = vmatprep.subr.bf16.mxu0 0
    %219 = vmatpush1.bf16.msra.mxu0 0
    %220 = vmatprep.subr.bf16.mxu0 0
    %221 = vmatpush1.bf16.msra.mxu0 0
    %222 = vmatprep.subr.bf16.mxu0 0
    %223 = vmatpush1.bf16.msra.mxu0 0
    %224 = vmatprep.mubr.bf16.mxu0 0
    %225 = vmatmul.mubr.bf16.gmra.mrb[0].mxu0 %v120
    %v226 = vpop.f32.mrb[0].mxu0
    %v227 = vadd.f32 %v142, %v226
    %v228 = vpop.f32.mrb[0].mxu0
    %v229 = vpop.f32.mrb[0].mxu0
    %v230 = vpop.f32.mrb[0].mxu0
    %231 = vdwg.mxu0
    %v232 = vmax.f32 %v227, 0.0
    %v233 = vpack.c.bf16 %v232, %v232
    %v234 = vld [vmem:[#allocation5] sm:$0xf]
    %v235 = vld [vmem:[#allocation5 + $0x4] sm:$0xf]
    %v236 = vld [vmem:[#allocation5 + $0x8] sm:$0xf]
    %v237 = vld [vmem:[#allocation5 + $0xc] sm:$0xf]
    %v238 = vld [vmem:[#allocation5 + $0x10] sm:$0xf]
    %v239 = vld [vmem:[#allocation5 + $0x14] sm:$0xf]
    %v240 = vld [vmem:[#allocation5 + $0x18] sm:$0xf]
    %v241 = vld [vmem:[#allocation5 + $0x1c] sm:$0xf]
    %v242 = vld [vmem:[#allocation5 + $0x20] sm:$0xf]
    %v243 = vld [vmem:[#allocation5 + $0x24] sm:$0xf]
    %v244 = vld [vmem:[#allocation5 + $0x28] sm:$0xf]
    %v245 = vld [vmem:[#allocation5 + $0x2c] sm:$0xf]
    %v246 = vld [vmem:[#allocation5 + $0x30] sm:$0xf]
    %v247 = vld [vmem:[#allocation5 + $0x34] sm:$0xf]
    %v248 = vld [vmem:[#allocation5 + $0x38] sm:$0xf]
    %v249 = vld [vmem:[#allocation5 + $0x3c] sm:$0xf]
    %v250 = vld [vmem:[%s6] sm:$0x1]
    %v252 = vlaneseq
    %v253 = vshrl.u32 %v252, 7
    %v254 = vsub.s32 0, %v253
    %v255 = vrot.slane %v250, %v254
    %v273 = vunpack.c.l.b16 %v234
    %v274 = vunpack.c.l.b16 %v235
    %v275 = vunpack.c.l.b16 %v236
    %v276 = vunpack.c.l.b16 %v237
    %v277 = vunpack.c.l.b16 %v238
    %v278 = vunpack.c.l.b16 %v239
    %v279 = vunpack.c.l.b16 %v240
    %v280 = vunpack.c.l.b16 %v241
    %v281 = vunpack.c.l.b16 %v242
    %v282 = vunpack.c.l.b16 %v243
    %v283 = vunpack.c.l.b16 %v244
    %v284 = vunpack.c.l.b16 %v245
    %v285 = vunpack.c.l.b16 %v246
    %v286 = vunpack.c.l.b16 %v247
    %v287 = vunpack.c.l.b16 %v248
    %v288 = vunpack.c.l.b16 %v249
    %v289 = vpack.c.b16 %v274, %v273
    %v290 = vpack.c.b16 %v276, %v275
    %v291 = vpack.c.b16 %v278, %v277
    %v292 = vpack.c.b16 %v280, %v279
    %v293 = vpack.c.b16 %v282, %v281
    %v294 = vpack.c.b16 %v284, %v283
    %v295 = vpack.c.b16 %v286, %v285
    %v296 = vpack.c.b16 %v288, %v287
    %305 = vmatprep.subr.bf16.mxu0 0
    %306 = vmatpush1.bf16.msra.mxu0 %v289
    %307 = vmatprep.subr.bf16.mxu0 0
    %308 = vmatpush1.bf16.msra.mxu0 %v290
    %309 = vmatprep.subr.bf16.mxu0 0
    %310 = vmatpush1.bf16.msra.mxu0 %v291
    %311 = vmatprep.subr.bf16.mxu0 0
    %312 = vmatpush1.bf16.msra.mxu0 %v292
    %313 = vmatprep.subr.bf16.mxu0 0
    %314 = vmatpush1.bf16.msra.mxu0 %v293
    %315 = vmatprep.subr.bf16.mxu0 0
    %316 = vmatpush1.bf16.msra.mxu0 %v294
    %317 = vmatprep.subr.bf16.mxu0 0
    %318 = vmatpush1.bf16.msra.mxu0 %v295
    %319 = vmatprep.subr.bf16.mxu0 0
    %320 = vmatpush1.bf16.msra.mxu0 %v296
    %321 = vmatprep.subr.bf16.mxu0 0
    %322 = vmatpush1.bf16.msra.mxu0 0
    %323 = vmatprep.subr.bf16.mxu0 0
    %324 = vmatpush1.bf16.msra.mxu0 0
    %325 = vmatprep.subr.bf16.mxu0 0
    %326 = vmatpush1.bf16.msra.mxu0 0
    %327 = vmatprep.subr.bf16.mxu0 0
    %328 = vmatpush1.bf16.msra.mxu0 0
    %329 = vmatprep.subr.bf16.mxu0 0
    %330 = vmatpush1.bf16.msra.mxu0 0
    %331 = vmatprep.subr.bf16.mxu0 0
    %332 = vmatpush1.bf16.msra.mxu0 0
    %333 = vmatprep.subr.bf16.mxu0 0
    %334 = vmatpush1.bf16.msra.mxu0 0
    %335 = vmatprep.subr.bf16.mxu0 0
    %336 = vmatpush1.bf16.msra.mxu0 0
    %337 = vmatprep.mubr.bf16.mxu0 0
    %338 = vmatmul.mubr.bf16.gmra.mrb[0].mxu0 %v233
    %v339 = vpop.f32.mrb[0].mxu0
    %v340 = vadd.f32 %v255, %v339
    %v341 = vpop.f32.mrb[0].mxu0
    %v342 = vpop.f32.mrb[0].mxu0
    %v343 = vpop.f32.mrb[0].mxu0
    %344 = vdwg.mxu0
    %v345 = vpack.c.bf16 %v340, %v340
    %346 = vst [vmem:[#allocation7] sm:$0xf] %v345
    // Predicated region
    $region38: #{network_forward.1} parent=1 // pred_check
      _
    $region39: #{network_forward.1} parent=1 // pred_check_branch
      %348 = sbr.rel (0) target = $region41
    $region40: #{network_forward.1} parent=1 // pred_region
      %s350 = ssub.s32 64, 64
      %351 = vsyncadd [#allocation4], %s350
      %s353 = sshll.u32 [#allocation7], 4
      %s354 = int_to_ptr.vmem [resolvable:$true] %s353
      %356 = dma.vmem_to_hbm [thread:$0]  %s354, 64, %s7, [#allocation4]
    $region41: #{network_forward.1} parent=1 // pred_fallthru
      _
    // Predicated region
    $region42: #{network_forward.1} parent=1 // pred_check
      _
    $region43: #{network_forward.1} parent=1 // pred_check_branch
      %358 = sbr.rel (0) target = $region45
    $region44: #{network_forward.1} parent=1 // pred_region
      %359 = dma.done [#allocation4], 64
    $region45: #{network_forward.1} parent=1 // pred_fallthru
      _
    %360 = vsyncpa [#allocation3], 1
    %361 = vsyncpa [#allocation6], 1
    %362 = vsyncpa [#allocation4], 1

</llo_original>
